<compile_context>
chip_gen: v7x
topology: tpu7x:2x2x1
jax: 0.10.0
libtpu: 0.0.40
codegen_flags: <defaults>
</compile_context>

<pallas_src>
import jax
import jax.numpy as jnp
from jax.experimental import pallas as pl
from jax.experimental.pallas import tpu as pltpu


# ---------------------------------------------------------------------------
# Kernel 1: fully fused per-batch SE block (pool + excite + 5-group sum + scale).
# ---------------------------------------------------------------------------
def _make_fused_kernel(inv_hw):
    def kernel(x_ref, w1_ref, w2_ref, o_ref):
        # x_ref : (1, C, HW)   caller dtype
        # w1_ref: (C, hidden)  f32  (== PyTorch fc[0].weight.T)
        # w2_ref: (hidden, Cg) f32  (== PyTorch fc[2].weight.T), Cg = C // 5
        # o_ref : (1, Cg, HW)  caller dtype
        cg = o_ref.shape[1]
        # Per-group slice reads off the ref: never materialize the whole (C, HW)
        # slab in f32 (that temp was a huge uncounted VMEM cost).
        acc = x_ref[:, 0:cg, :].astype(jnp.float32)                 # (1, Cg, HW)
        pooled_parts = [jnp.sum(acc, axis=-1)]                      # (1, Cg)
        for g in range(1, 5):
            xg = x_ref[:, g * cg:(g + 1) * cg, :].astype(jnp.float32)
            pooled_parts.append(jnp.sum(xg, axis=-1))
            acc = acc + xg
        pooled = jnp.concatenate(pooled_parts, axis=-1) * inv_hw     # (1, C)

        # Excitation: Linear -> ReLU -> Linear -> Sigmoid (bias-free, tiny M=1).
        h = jnp.maximum(
            jnp.dot(pooled, w1_ref[...], preferred_element_type=jnp.float32), 0.0)
        y = jax.nn.sigmoid(
            jnp.dot(h, w2_ref[...], preferred_element_type=jnp.float32))  # (1, Cg)

        o_ref[...] = (acc * y[:, :, None]).astype(o_ref.dtype)
    return kernel


# ---------------------------------------------------------------------------
# Kernel 2a (two-stage pass 1): single read of x -> group sum + pooled vector.
# ---------------------------------------------------------------------------
def _make_sum_pool_kernel(inv_hw):
    def kernel(x_ref, s_ref, pooled_ref):
        # x_ref     : (1, C, T)   caller dtype   (T = lane-dense HW tile)
        # s_ref     : (1, Cg, T)  caller dtype   (unscaled 5-group sum)
        # pooled_ref: (1, 1, C)   f32, resident accumulator across the tile axis
        cg = s_ref.shape[1]
        acc = x_ref[:, 0:cg, :].astype(jnp.float32)
        parts = [jnp.sum(acc, axis=-1)]
        for g in range(1, 5):
            xg = x_ref[:, g * cg:(g + 1) * cg, :].astype(jnp.float32)
            parts.append(jnp.sum(xg, axis=-1))
            acc = acc + xg
        s_ref[...] = acc.astype(s_ref.dtype)

        partial = (jnp.concatenate(parts, axis=-1) * inv_hw)[:, None, :]  # (1,1,C)

        @pl.when(pl.program_id(1) == 0)
        def _():
            pooled_ref[...] = jnp.zeros_like(pooled_ref)

        pooled_ref[...] += partial
    return kernel


# ---------------------------------------------------------------------------
# Kernel 2b (two-stage pass 2): channel-wise scale of the precomputed group sum.
# ---------------------------------------------------------------------------
def _scale_kernel(s_ref, y_ref, o_ref):
    # s_ref: (1, Cg, T); y_ref: (1, Cg, 1) f32; o_ref: (1, Cg, T)
    o_ref[...] = (s_ref[...].astype(jnp.float32) * y_ref[...]).astype(o_ref.dtype)


# ---------------------------------------------------------------------------
# Helpers
# ---------------------------------------------------------------------------
def _vmem_capacity_bytes():
    try:
        info = pltpu.get_tpu_info()
        cap = getattr(info, "vmem_capacity_bytes", None)
        if cap:
            return int(cap)
    except Exception:
        pass
    return 64 * 1024 * 1024  # conservative fallback: assume v7x-class 64 MiB VMEM


def _pick_hw_tile(hw, c, cg, itemsize, budget_bytes):
    """Largest lane-dense tile (multiple of 128, dividing hw) whose double-buffered
    in/out blocks + in-kernel f32 temps stay under the VMEM budget."""
    per_col = 2 * (c + cg) * itemsize + 2 * cg * 4
    eligible = [t for t in {hw, 8192, 4096, 2048, 1024, 512, 256, 128}
                if hw % t == 0 and per_col * t <= budget_bytes]
    return max(eligible) if eligible else 128


def _streaming_spec(shape, index_map, deep):
    """x BlockSpec, with 3-deep buffering when tiles are small (hides DMA/step cost)."""
    if deep:
        try:
            return pl.BlockSpec(shape, index_map, pipeline_mode=pl.Buffered(3))
        except Exception:
            pass
    return pl.BlockSpec(shape, index_map)


# ---------------------------------------------------------------------------
# Wrapper
# ---------------------------------------------------------------------------
def se_block_forward(x_nchw, w1_t, w2_t, *, force_two_stage=False):
    """x_nchw: (B, C, H, W); w1_t: (C, C//r); w2_t: (C//r, C//5) -> (B, C//5, H, W)."""
    B, C, H, W = x_nchw.shape
    assert C % 5 == 0
    Cg = C // 5
    HW = H * W
    hidden = w1_t.shape[1]
    itemsize = x_nchw.dtype.itemsize
    out_dtype = x_nchw.dtype
    # NOTE: channel-group slices run along the sublane axis; Cg should be a multiple
    # of the sublane pack (8 for f32, 16 for bf16) to avoid in-kernel relayouts.

    MiB = 1024 * 1024
    vmem_cap = _vmem_capacity_bytes()
    if vmem_cap >= 100 * MiB:          # v5e / v6e: 128 MiB physical VMEM
        fused_thresh, fused_limit = 48 * MiB, 96 * MiB
        tile_budget, stage_limit = 32 * MiB, 64 * MiB
    else:                               # v7x-class: 64 MiB physical VMEM
        fused_thresh, fused_limit = 24 * MiB, 44 * MiB
        tile_budget, stage_limit = 16 * MiB, 40 * MiB

    w1_f = w1_t.astype(jnp.float32)
    w2_f = w2_t.astype(jnp.float32)
    x = x_nchw.reshape(B, C, HW)        # keep caller dtype: the op is HBM-bound

    # Fused-path footprint: double-buffered in/out blocks + in-kernel f32 acc/slice.
    fused_footprint = 2 * (C + Cg) * HW * itemsize + 2 * Cg * HW * 4

    if (not force_two_stage) and fused_footprint <= fused_thresh:
        # ---- Path 1: fully fused, one pass over x, grid over batch ----
        # TODO(synk): on v7x grid=(B,) only spreads work across the 2 TensorCores via
        # B; B=1 leaves one core idle (impact limited since the op is HBM-bound).
        cost = pl.CostEstimate(
            flops=B * (C * HW + 5 * Cg * HW + 2 * C * hidden + 2 * hidden * Cg),
            transcendentals=B * Cg,
            bytes_accessed=(B * C * HW + B * Cg * HW) * itemsize
                           + (w1_t.size + w2_t.size) * 4)
        out = pl.pallas_call(
            _make_fused_kernel(1.0 / HW),
            out_shape=jax.ShapeDtypeStruct((B, Cg, HW), out_dtype),
            grid=(B,),
            in_specs=[
                pl.BlockSpec((1, C, HW), lambda b: (b, 0, 0)),
                pl.BlockSpec((C, hidden), lambda b: (0, 0)),
                pl.BlockSpec((hidden, Cg), lambda b: (0, 0)),
            ],
            out_specs=pl.BlockSpec((1, Cg, HW), lambda b: (b, 0, 0)),
            compiler_params=pltpu.CompilerParams(
                dimension_semantics=("parallel",),
                vmem_limit_bytes=fused_limit),
            cost_estimate=cost,
        )(x, w1_f, w2_f)
        return out.reshape(B, Cg, H, W)

    # ---- Path 2: two-stage, single HBM read of x ----
    # Pad HW to a lane-dense multiple of 128 so tiles divide evenly and stores are
    # unmasked (zero padding does not perturb the pool: we divide by the true HW).
    HWp = ((HW + 127) // 128) * 128
    if HWp != HW:
        x = jnp.pad(x, ((0, 0), (0, 0), (0, HWp - HW)))

    tile = _pick_hw_tile(HWp, C, Cg, itemsize, tile_budget)
    n_tiles = HWp // tile
    deep = (tile <= 512) and (n_tiles >= 4)

    # Pass 1: group sum + pooled vector in one pass over x.
    cost1 = pl.CostEstimate(
        flops=B * (C * HW + 4 * Cg * HW),
        transcendentals=0,
        bytes_accessed=(B * C * HWp + B * Cg * HWp) * itemsize + B * C * 4)
    s, pooled = pl.pallas_call(
        _make_sum_pool_kernel(1.0 / HW),
        out_shape=(jax.ShapeDtypeStruct((B, Cg, HWp), out_dtype),
                   jax.ShapeDtypeStruct((B, 1, C), jnp.float32)),
        grid=(B, n_tiles),
        in_specs=[_streaming_spec((1, C, tile), lambda b, t: (b, 0, t), deep)],
        out_specs=[pl.BlockSpec((1, Cg, tile), lambda b, t: (b, 0, t)),
                   pl.BlockSpec((1, 1, C), lambda b, t: (b, 0, 0))],
        compiler_params=pltpu.CompilerParams(
            dimension_semantics=("parallel", "arbitrary"),
            vmem_limit_bytes=stage_limit),
        cost_estimate=cost1,
    )(x)

    # Tiny excitation FCs on the (B, C) pooled vector: plain XLA.
    h = jnp.maximum(pooled.reshape(B, C) @ w1_f, 0.0)
    y = jax.nn.sigmoid(h @ w2_f).reshape(B, Cg, 1)                  # (B, Cg, 1) f32

    # Pass 2: scale the group sum by the gate; alias s's buffer for the output.
    cost2 = pl.CostEstimate(
        flops=B * Cg * HWp,
        transcendentals=0,
        bytes_accessed=2 * B * Cg * HWp * itemsize + B * Cg * 4)
    out = pl.pallas_call(
        _scale_kernel,
        out_shape=jax.ShapeDtypeStruct((B, Cg, HWp), out_dtype),
        grid=(B, n_tiles),
        in_specs=[pl.BlockSpec((1, Cg, tile), lambda b, t: (b, 0, t)),
                  pl.BlockSpec((1, Cg, 1), lambda b, t: (b, 0, 0))],
        out_specs=pl.BlockSpec((1, Cg, tile), lambda b, t: (b, 0, t)),
        compiler_params=pltpu.CompilerParams(
            dimension_semantics=("parallel", "parallel"),
            vmem_limit_bytes=stage_limit),
        cost_estimate=cost2,
        input_output_aliases={0: 0},
    )(s, y)

    if HWp != HW:
        out = out[:, :, :HW]
    return out.reshape(B, Cg, H, W)


# ---------------------------------------------------------------------------
# Reference & test
# ---------------------------------------------------------------------------
def _reference(x_nchw, w1_t, w2_t):
    B, C, H, W = x_nchw.shape
    Cg = C // 5
    xf = x_nchw.astype(jnp.float32)
    pooled = jnp.mean(xf, axis=(2, 3))                                   # (B, C)
    y = jax.nn.sigmoid(jnp.maximum(pooled @ w1_t, 0.0) @ w2_t)           # (B, Cg)
    out = jnp.sum(xf.reshape(B, 5, Cg, H, W), axis=1)                    # (B, Cg, H, W)
    return out * y[:, :, None, None]


if __name__ == "__main__":
    # Small shapes consistent with the module: ch_in divisible by 5 and >= reduction.
    # (Original module: ch_in=5120 -> 5 slices of 1024; scaled down here.)
    B, C, H, W = 2, 80, 16, 16
    reduction = 16
    hidden = C // reduction      # 5
    Cg = C // 5                  # 16

    key = jax.random.PRNGKey(0)
    kx, k1, k2 = jax.random.split(key, 3)
    x = jax.random.normal(kx, (B, C, H, W), dtype=jnp.float32)
    # Weights stored pre-transposed (x @ W^T convention of nn.Linear).
    w1_t = jax.random.normal(k1, (C, hidden), dtype=jnp.float32) * 0.1
    w2_t = jax.random.normal(k2, (hidden, Cg), dtype=jnp.float32) * 0.1

    ref = _reference(x, w1_t, w2_t)

    # Path 1: fused per-batch kernel (selected automatically for small slabs).
    out_fused = jax.block_until_ready(se_block_forward(x, w1_t, w2_t))
    assert out_fused.shape == (B, Cg, H, W)
    assert jnp.allclose(out_fused, ref, atol=1e-4, rtol=1e-4)

    # Path 2: two-stage (single-read pass-1 kernel + XLA gate + scale kernel).
    out_split = jax.block_until_ready(
        se_block_forward(x, w1_t, w2_t, force_two_stage=True))
    assert out_split.shape == (B, Cg, H, W)
    assert jnp.allclose(out_split, ref, atol=1e-4, rtol=1e-4)

    print("KERNEL_OK")
</pallas_src>

<mosaic_0001>
module attributes {stable_mosaic.version = 11 : i64} {
  func.func @kernel(%arg0: i32, %arg1: memref<1x80x256xf32, #tpu.memory_space<vmem>>, %arg2: memref<80x5xf32, #tpu.memory_space<vmem>>, %arg3: memref<5x16xf32, #tpu.memory_space<vmem>>, %arg4: memref<1x16x256xf32, #tpu.memory_space<vmem>>) attributes {dimension_semantics = [#tpu.dimension_semantics<parallel>], iteration_bounds = array<i64: 2>, scalar_prefetch = 0 : i64, scratch_operands = 0 : i64, tpu.core_type = #tpu.core_type<tc>, window_params = [{transform_indices = @transform_0, window_bounds = array<i64: 1, 80, 256>}, {pipeline_mode = #tpu.pipeline_mode<synchronous>, transform_indices = @transform_1, window_bounds = array<i64: 80, 5>}, {pipeline_mode = #tpu.pipeline_mode<synchronous>, transform_indices = @transform_2, window_bounds = array<i64: 5, 16>}, {transform_indices = @transform_3, window_bounds = array<i64: 1, 16, 256>}]} {
    %c0 = arith.constant 0 : index
    %c0_0 = arith.constant 0 : index
    %c0_1 = arith.constant 0 : index
    %0 = vector.load %arg1[%c0, %c0_0, %c0_1] : memref<1x80x256xf32, #tpu.memory_space<vmem>>, vector<1x16x256xf32>
    %cst = arith.constant dense<0.000000e+00> : vector<1x16xf32>
    %1 = vector.multi_reduction <add>, %0, %cst [2] : vector<1x16x256xf32> to vector<1x16xf32>
    %c0_2 = arith.constant 0 : index
    %c16 = arith.constant 16 : index
    %c0_3 = arith.constant 0 : index
    %2 = vector.load %arg1[%c0_2, %c16, %c0_3] : memref<1x80x256xf32, #tpu.memory_space<vmem>>, vector<1x16x256xf32>
    %cst_4 = arith.constant dense<0.000000e+00> : vector<1x16xf32>
    %3 = vector.multi_reduction <add>, %2, %cst_4 [2] : vector<1x16x256xf32> to vector<1x16xf32>
    %4 = arith.addf %0, %2 : vector<1x16x256xf32>
    %c0_5 = arith.constant 0 : index
    %c32 = arith.constant 32 : index
    %c0_6 = arith.constant 0 : index
    %5 = vector.load %arg1[%c0_5, %c32, %c0_6] : memref<1x80x256xf32, #tpu.memory_space<vmem>>, vector<1x16x256xf32>
    %cst_7 = arith.constant dense<0.000000e+00> : vector<1x16xf32>
    %6 = vector.multi_reduction <add>, %5, %cst_7 [2] : vector<1x16x256xf32> to vector<1x16xf32>
    %7 = arith.addf %4, %5 : vector<1x16x256xf32>
    %c0_8 = arith.constant 0 : index
    %c48 = arith.constant 48 : index
    %c0_9 = arith.constant 0 : index
    %8 = vector.load %arg1[%c0_8, %c48, %c0_9] : memref<1x80x256xf32, #tpu.memory_space<vmem>>, vector<1x16x256xf32>
    %cst_10 = arith.constant dense<0.000000e+00> : vector<1x16xf32>
    %9 = vector.multi_reduction <add>, %8, %cst_10 [2] : vector<1x16x256xf32> to vector<1x16xf32>
    %10 = arith.addf %7, %8 : vector<1x16x256xf32>
    %c0_11 = arith.constant 0 : index
    %c64 = arith.constant 64 : index
    %c0_12 = arith.constant 0 : index
    %11 = vector.load %arg1[%c0_11, %c64, %c0_12] : memref<1x80x256xf32, #tpu.memory_space<vmem>>, vector<1x16x256xf32>
    %cst_13 = arith.constant dense<0.000000e+00> : vector<1x16xf32>
    %12 = vector.multi_reduction <add>, %11, %cst_13 [2] : vector<1x16x256xf32> to vector<1x16xf32>
    %13 = arith.addf %10, %11 : vector<1x16x256xf32>
    %14 = tpu.concatenate %1, %3, %6, %9, %12 in 1 : vector<1x16xf32>, vector<1x16xf32>, vector<1x16xf32>, vector<1x16xf32>, vector<1x16xf32> -> vector<1x80xf32>
    %cst_14 = arith.constant 3.906250e-03 : f32
    %15 = vector.broadcast %cst_14 : f32 to vector<1x80xf32>
    %16 = arith.mulf %14, %15 : vector<1x80xf32>
    %c0_15 = arith.constant 0 : index
    %c0_16 = arith.constant 0 : index
    %17 = vector.load %arg2[%c0_15, %c0_16] : memref<80x5xf32, #tpu.memory_space<vmem>>, vector<80x5xf32>
    %cst_17 = arith.constant dense<0.000000e+00> : vector<1x5xf32>
    %18 = tpu.matmul %16, %17, %cst_17 {dimension_numbers = #tpu.dot_dimension_numbers<[1], [0], [0], [1], [0, 0, 1, 1], [], []>} : vector<1x80xf32>, vector<80x5xf32>, vector<1x5xf32> -> vector<1x5xf32>
    %cst_18 = arith.constant 0.000000e+00 : f32
    %19 = vector.broadcast %cst_18 : f32 to vector<1x5xf32>
    %20 = arith.maximumf %18, %19 : vector<1x5xf32>
    %c0_19 = arith.constant 0 : index
    %c0_20 = arith.constant 0 : index
    %21 = vector.load %arg3[%c0_19, %c0_20] : memref<5x16xf32, #tpu.memory_space<vmem>>, vector<5x16xf32>
    %cst_21 = arith.constant dense<0.000000e+00> : vector<1x16xf32>
    %22 = tpu.matmul %20, %21, %cst_21 {dimension_numbers = #tpu.dot_dimension_numbers<[1], [0], [0], [1], [0, 0, 1, 1], [], []>} : vector<1x5xf32>, vector<5x16xf32>, vector<1x16xf32> -> vector<1x16xf32>
    %23 = arith.negf %22 : vector<1x16xf32>
    %24 = math.exp %23 : vector<1x16xf32>
    %cst_22 = arith.constant 1.000000e+00 : f32
    %25 = vector.broadcast %cst_22 : f32 to vector<1x16xf32>
    %26 = arith.addf %25, %24 : vector<1x16xf32>
    %27 = arith.divf %25, %26 : vector<1x16xf32>
    %28 = vector.shape_cast %27 : vector<1x16xf32> to vector<1x16x1xf32>
    %29 = vector.broadcast %28 : vector<1x16x1xf32> to vector<1x16x256xf32>
    %30 = arith.mulf %13, %29 : vector<1x16x256xf32>
    %c0_23 = arith.constant 0 : index
    %c0_24 = arith.constant 0 : index
    %c0_25 = arith.constant 0 : index
    %31 = vector.load %arg4[%c0_23, %c0_24, %c0_25] : memref<1x16x256xf32, #tpu.memory_space<vmem>>, vector<1x16x256xf32>
    tpu.vector_store %arg4[%c0_23, %c0_24, %c0_25], %30 {strides = array<i32>} : memref<1x16x256xf32, #tpu.memory_space<vmem>>, vector<1x16x256xf32>,
    return
  }
  func.func @transform_0(%arg0: i32) -> (i32, i32, i32) {
    %c0_i32 = arith.constant 0 : i32
    %c0_i32_0 = arith.constant 0 : i32
    %c0_i32_1 = arith.constant 0 : i32
    return %arg0, %c0_i32, %c0_i32_0 : i32, i32, i32
  }
  func.func @transform_1(%arg0: i32) -> (i32, i32) {
    %c0_i32 = arith.constant 0 : i32
    %c0_i32_0 = arith.constant 0 : i32
    %c0_i32_1 = arith.constant 0 : i32
    return %c0_i32, %c0_i32_0 : i32, i32
  }
  func.func @transform_2(%arg0: i32) -> (i32, i32) {
    %c0_i32 = arith.constant 0 : i32
    %c0_i32_0 = arith.constant 0 : i32
    %c0_i32_1 = arith.constant 0 : i32
    return %c0_i32, %c0_i32_0 : i32, i32
  }
  func.func @transform_3(%arg0: i32) -> (i32, i32, i32) {
    %c0_i32 = arith.constant 0 : i32
    %c0_i32_0 = arith.constant 0 : i32
    %c0_i32_1 = arith.constant 0 : i32
    return %arg0, %c0_i32, %c0_i32_0 : i32, i32, i32
  }
}

</mosaic_0001>

<llo_original>
// kernel: tpu_custom_call.1
$region0: #{tpu_custom_call.1}
  #allocation0 [shape = 'u32[]', space=smem, size = 0x4, offset = 0x4, fixed_abs, tag = 'smem constant byte address 0x4 - core index']
  #allocation1 [shape = 'u32[144,128]{1,0:T(1,128)}', space=vmem, size = 0x12000, scoped, tag = 'internal scratch']
  %s0 = inlined_call_operand.hbm [shape: f32[2,80,256], index: 0, kind: input, shape index: {}]
  %s1 = inlined_call_operand.vmem [shape: f32[80,5], index: 1, kind: input, shape index: {}]
  %s2 = inlined_call_operand.vmem [shape: f32[5,16], index: 2, kind: input, shape index: {}]
  %s3 = inlined_call_operand.hbm [shape: f32[2,16,256], index: 3, kind: output, shape index: {}]
  %s4 = sld [smem:[#allocation0]]
  $region49: #{tpu_custom_call.1} parent=0
    _
  %s6 = ssub.s32 1, %s4
  %s7 = scalar_select 0, %s6, %s4
  $region1: #{tpu_custom_call.1} parent=0
    #allocation2 [shape = 'u8[163840]{0}', space=vmem, size = 0x28000, scoped, tag = 'input window, operand 0']
    #allocation3 [shape = 's32[2]{0}', space=sflag, size = 0x8, scoped, tag = 'scoped memory for tpu_custom_call.1']
    #allocation4 [shape = 's32[2]{0}', space=sflag, size = 0x8, scoped, tag = 'scoped memory for tpu_custom_call.1']
    #allocation5 [shape = 'u8[32768]{0}', space=vmem, size = 0x8000, scoped, tag = 'output window, operand 0']
    %8 = vsyncpa [#allocation3], 0
    %s9 = scalar_lea.sflag [#allocation3], 1
    %10 = vsyncpa %s9, 0
    %11 = vsyncpa [#allocation4], 0
    %s12 = scalar_lea.sflag [#allocation4], 1
    %13 = vsyncpa %s12, 0
    loop: start=0, step=1, limit=4
    $region2: #{tpu_custom_call.1} parent=1 // loop_pre_header
      _
    $region3: #{tpu_custom_call.1} parent=1 // loop_header
      %s15 = sphi 0, %s19
      %p16 = scmp.ge.s32.totalorder %s15, 4
      %s25 = sphi 0, %s27
      %s28 = sphi 0, %s25
      %s29 = sphi 0, %s28
      %s45 = sphi 0, %s29
      %s49 = sphi 0, %s49
      %s51 = sphi 0, %s49
      %s52 = sphi 0, %s51
      %s66 = sphi 0, %s52
      %s70 = sphi 0, %s70
      %s72 = sphi 0, %s70
      %s73 = sphi 0, %s72
      %s87 = sphi 0, %s73
      %s93 = sphi 0, %s95
      %s96 = sphi 0, %s93
      %s97 = sphi 0, %s96
      %s113 = sphi 0, %s97
    $region4: #{tpu_custom_call.1} parent=1 // loop_header_branch
      %18 = sbr.rel (%p16) target = $region8
    $region5: #{tpu_custom_call.1} parent=1 // loop_body
      %s20 = ssub.s32 %s15, 1
      %s21 = ssub.s32 %s15, 2
      %s22 = sadd.s32 %s15, 1
      %s23 = ssub.s32 %s15, %s22
      %p24 = scmp.eq.s32.totalorder %s23, 0
      %s26 = sadd.s32 %s25, 1
      %s27 = scalar_select %p24, %s25, %s26
      %p30 = pneg %p24
      %p31 = scmp.eq.s32.totalorder %s15, 1
      %p32 = por %p30, %p31
      %p33 = scmp.ne.s32.totalorder %s25, %s28
      %p34 = scmp.eq.s32.totalorder %s15, 0
      %p35 = por %p33, %p34
      %p36 = scmp.ne.s32.totalorder %s25, %s28
      %p37 = scmp.eq.s32.totalorder %s20, 1
      %p38 = por %p36, %p37
      %p39 = scmp.ne.s32.totalorder %s28, %s29
      %p40 = scmp.eq.s32.totalorder %s20, 0
      %p41 = por %p39, %p40
      %p42 = scmp.ne.s32.totalorder %s28, %s29
      %p43 = scmp.eq.s32.totalorder %s21, 1
      %p44 = por %p42, %p43
      %p46 = scmp.ne.s32.totalorder %s29, %s45
      %p47 = scmp.eq.s32.totalorder %s21, 0
      %p48 = por %p46, %p47
      %s50 = sadd.s32 %s49, 1
      %p53 = scmp.eq.s32.totalorder %s15, 1
      %p54 = scmp.ne.s32.totalorder %s49, %s51
      %p55 = scmp.eq.s32.totalorder %s15, 0
      %p56 = por %p54, %p55
      %p57 = scmp.ne.s32.totalorder %s49, %s51
      %p58 = scmp.eq.s32.totalorder %s20, 1
      %p59 = por %p57, %p58
      %p60 = scmp.ne.s32.totalorder %s51, %s52
      %p61 = scmp.eq.s32.totalorder %s20, 0
      %p62 = por %p60, %p61
      %p63 = scmp.ne.s32.totalorder %s51, %s52
      %p64 = scmp.eq.s32.totalorder %s21, 1
      %p65 = por %p63, %p64
      %p67 = scmp.ne.s32.totalorder %s52, %s66
      %p68 = scmp.eq.s32.totalorder %s21, 0
      %p69 = por %p67, %p68
      %s71 = sadd.s32 %s70, 1
      %p74 = scmp.eq.s32.totalorder %s15, 1
      %p75 = scmp.ne.s32.totalorder %s70, %s72
      %p76 = scmp.eq.s32.totalorder %s15, 0
      %p77 = por %p75, %p76
      %p78 = scmp.ne.s32.totalorder %s70, %s72
      %p79 = scmp.eq.s32.totalorder %s20, 1
      %p80 = por %p78, %p79
      %p81 = scmp.ne.s32.totalorder %s72, %s73
      %p82 = scmp.eq.s32.totalorder %s20, 0
      %p83 = por %p81, %p82
      %p84 = scmp.ne.s32.totalorder %s72, %s73
      %p85 = scmp.eq.s32.totalorder %s21, 1
      %p86 = por %p84, %p85
      %p88 = scmp.ne.s32.totalorder %s73, %s87
      %p89 = scmp.eq.s32.totalorder %s21, 0
      %p90 = por %p88, %p89
      %s91 = ssub.s32 %s15, %s22
      %p92 = scmp.eq.s32.totalorder %s91, 0
      %s94 = sadd.s32 %s93, 1
      %s95 = scalar_select %p92, %s93, %s94
      %p98 = pneg %p92
      %p99 = scmp.eq.s32.totalorder %s15, 1
      %p100 = por %p98, %p99
      %p101 = scmp.ne.s32.totalorder %s93, %s96
      %p102 = scmp.eq.s32.totalorder %s15, 0
      %p103 = por %p101, %p102
      %p104 = scmp.ne.s32.totalorder %s93, %s96
      %p105 = scmp.eq.s32.totalorder %s20, 1
      %p106 = por %p104, %p105
      %p107 = scmp.ne.s32.totalorder %s96, %s97
      %p108 = scmp.eq.s32.totalorder %s20, 0
      %p109 = por %p107, %p108
      %p110 = scmp.ne.s32.totalorder %s96, %s97
      %p111 = scmp.eq.s32.totalorder %s21, 1
      %p112 = por %p110, %p111
      %p114 = scmp.ne.s32.totalorder %s97, %s113
      %p115 = scmp.eq.s32.totalorder %s21, 0
      %p116 = por %p114, %p115
      %p117 = scmp.le.s32.totalorder 1, %s15
      %p118 = scmp.lt.s32.totalorder %s15, 3
      %p119 = pnand %p117, %p118
      %p120 = pneg %p119
      // Predicated region
      $region9: #{tpu_custom_call.1} parent=5 // pred_check
        _
      $region10: #{tpu_custom_call.1} parent=5 // pred_check_branch
        %122 = sbr.rel (%p119) target = $region12
      $region11: #{tpu_custom_call.1} parent=5 // pred_region
        %s123 = ssub.s32 %s15, 1
        // Predicated region
        $region13: #{tpu_custom_call.1} parent=11 // pred_check
          %p124 = pneg %p62
        $region14: #{tpu_custom_call.1} parent=11 // pred_check_branch
          %126 = sbr.rel (%p124) target = $region16
        $region15: #{tpu_custom_call.1} parent=11 // pred_region
          _
        $region16: #{tpu_custom_call.1} parent=11 // pred_fallthru
          _
        // Predicated region
        $region17: #{tpu_custom_call.1} parent=11 // pred_check
          %p127 = pneg %p83
        $region18: #{tpu_custom_call.1} parent=11 // pred_check_branch
          %129 = sbr.rel (%p127) target = $region20
        $region19: #{tpu_custom_call.1} parent=11 // pred_region
          _
        $region20: #{tpu_custom_call.1} parent=11 // pred_fallthru
          _
      $region12: #{tpu_custom_call.1} parent=5 // pred_fallthru
        _
      %p130 = scmp.lt.s32.totalorder %s15, 2
      // Predicated region
      $region21: #{tpu_custom_call.1} parent=5 // pred_check
        %p131 = pneg %p130
      $region22: #{tpu_custom_call.1} parent=5 // pred_check_branch
        %133 = sbr.rel (%p131) target = $region24
      $region23: #{tpu_custom_call.1} parent=5 // pred_region
        // Predicated region
        $region25: #{tpu_custom_call.1} parent=23 // pred_check
          %p134 = pneg %p35
        $region26: #{tpu_custom_call.1} parent=23 // pred_check_branch
          %136 = sbr.rel (%p134) target = $region28
        $region27: #{tpu_custom_call.1} parent=23 // pred_region
          %s137 = sand.u32 %s25, 1
          %s138 = scalar_lea.sflag [#allocation3], %s137
          %s139 = sand.u32 %s25, 1
          %s140 = smul.addr %s139, 160
          %s141 = scalar_lea.vmem [#allocation2], %s140
          %s143 = ssub.s32 2560, 2560
          %144 = vsyncadd %s138, %s143
          %s145 = smul.addr %s15, 20
          %s146 = smul.addr %s145, 128
          %s147 = scalar_lea.hbm %s0, %s146
          %s148 = sshll.u32 %s141, 4
          %s149 = int_to_ptr.vmem [resolvable:$true] %s148
          %154 = dma.hbm_to_vmem [thread:$0]  %s147, 2560, %s149, %s138, 256, 256, 16
        $region28: #{tpu_custom_call.1} parent=23 // pred_fallthru
          _
      $region24: #{tpu_custom_call.1} parent=5 // pred_fallthru
        _
      %p155 = scmp.le.s32.totalorder 1, %s15
      %p156 = scmp.lt.s32.totalorder %s15, 3
      %p157 = pnand %p155, %p156
      %p158 = pneg %p157
      // Predicated region
      $region29: #{tpu_custom_call.1} parent=5 // pred_check
        _
      $region30: #{tpu_custom_call.1} parent=5 // pred_check_branch
        %160 = sbr.rel (%p157) target = $region32
      $region31: #{tpu_custom_call.1} parent=5 // pred_region
        %s161 = ssub.s32 %s15, 1
        %s162 = sand.u32 %s28, 1
        %s163 = scalar_lea.sflag [#allocation3], %s162
        %s164 = sand.u32 %s28, 1
        %s165 = smul.addr %s164, 160
        %s166 = scalar_lea.vmem [#allocation2], %s165
        // Predicated region
        $region33: #{tpu_custom_call.1} parent=31 // pred_check
          %p167 = pneg %p41
        $region34: #{tpu_custom_call.1} parent=31 // pred_check_branch
          %169 = sbr.rel (%p167) target = $region36
        $region35: #{tpu_custom_call.1} parent=31 // pred_region
          %170 = dma.done %s163, 2560
        $region36: #{tpu_custom_call.1} parent=31 // pred_fallthru
          _
        %s171 = sand.u32 %s28, 1
        %s172 = scalar_lea.sflag [#allocation3], %s171
        %s173 = sand.u32 %s28, 1
        %s174 = smul.addr %s173, 160
        %s175 = scalar_lea.vmem [#allocation2], %s174
        %p176 = pneg %p41
        %p177 = pneg %p38
        %p178 = pneg %p62
        %p179 = pneg %p59
        %p180 = pneg %p83
        %p181 = pneg %p80
        %p182 = pneg %p109
        %p183 = pneg %p106
        %s184 = sand.u32 %s96, 1
        %s185 = scalar_lea.sflag [#allocation4], %s184
        %s186 = sand.u32 %s96, 1
        %s187 = smul.addr %s186, 32
        %s188 = scalar_lea.vmem [#allocation5], %s187
        %v189 = vld [vmem:[%s166] sm:$0xff]
        %v190 = vld [vmem:[%s166 + $0x8] sm:$0xff]
        %v191 = vld [vmem:[%s166 + $0x10] sm:$0xff]
        %v192 = vld [vmem:[%s166 + $0x18] sm:$0xff]
        %v193 = vadd.f32 %v189, %v190
        %194 = vadd.xlane.f32.xlu0 %v193
        %v195 = vpop.xlane.xlu0 %194
        %v196 = vadd.f32 %v191, %v192
        %197 = vadd.xlane.f32.xlu0 %v196
        %v198 = vpop.xlane.xlu0 %197
        %v199 = vld [vmem:[%s166 + $0x20] sm:$0xff]
        %v200 = vld [vmem:[%s166 + $0x28] sm:$0xff]
        %v201 = vld [vmem:[%s166 + $0x30] sm:$0xff]
        %v202 = vld [vmem:[%s166 + $0x38] sm:$0xff]
        %v203 = vadd.f32 %v199, %v200
        %204 = vadd.xlane.f32.xlu0 %v203
        %v205 = vpop.xlane.xlu0 %204
        %v206 = vadd.f32 %v201, %v202
        %207 = vadd.xlane.f32.xlu0 %v206
        %v208 = vpop.xlane.xlu0 %207
        %v209 = vadd.f32 %v189, %v199
        %v210 = vadd.f32 %v190, %v200
        %v211 = vadd.f32 %v191, %v201
        %v212 = vadd.f32 %v192, %v202
        %v213 = vld [vmem:[%s166 + $0x40] sm:$0xff]
        %v214 = vld [vmem:[%s166 + $0x48] sm:$0xff]
        %v215 = vld [vmem:[%s166 + $0x50] sm:$0xff]
        %v216 = vld [vmem:[%s166 + $0x58] sm:$0xff]
        %v217 = vadd.f32 %v213, %v214
        %218 = vadd.xlane.f32.xlu0 %v217
        %v219 = vpop.xlane.xlu0 %218
        %v220 = vadd.f32 %v215, %v216
        %221 = vadd.xlane.f32.xlu0 %v220
        %v222 = vpop.xlane.xlu0 %221
        %v223 = vadd.f32 %v209, %v213
        %v224 = vadd.f32 %v210, %v214
        %v225 = vadd.f32 %v211, %v215
        %v226 = vadd.f32 %v212, %v216
        %v227 = vld [vmem:[%s166 + $0x60] sm:$0xff]
        %v228 = vld [vmem:[%s166 + $0x68] sm:$0xff]
        %v229 = vld [vmem:[%s166 + $0x70] sm:$0xff]
        %v230 = vld [vmem:[%s166 + $0x78] sm:$0xff]
        %v231 = vadd.f32 %v227, %v228
        %232 = vadd.xlane.f32.xlu0 %v231
        %v233 = vpop.xlane.xlu0 %232
        %v234 = vadd.f32 %v229, %v230
        %235 = vadd.xlane.f32.xlu0 %v234
        %v236 = vpop.xlane.xlu0 %235
        %v237 = vadd.f32 %v223, %v227
        %v238 = vadd.f32 %v224, %v228
        %v239 = vadd.f32 %v225, %v229
        %v240 = vadd.f32 %v226, %v230
        %v241 = vld [vmem:[%s166 + $0x80] sm:$0xff]
        %v242 = vld [vmem:[%s166 + $0x88] sm:$0xff]
        %v243 = vld [vmem:[%s166 + $0x90] sm:$0xff]
        %v244 = vld [vmem:[%s166 + $0x98] sm:$0xff]
        %v245 = vadd.f32 %v241, %v242
        %246 = vadd.xlane.f32.xlu0 %v245
        %v247 = vpop.xlane.xlu0 %246
        %v248 = vadd.f32 %v243, %v244
        %249 = vadd.xlane.f32.xlu0 %v248
        %v250 = vpop.xlane.xlu0 %249
        %v251 = vadd.f32 %v237, %v241
        %v252 = vadd.f32 %v238, %v242
        %v253 = vadd.f32 %v239, %v243
        %v254 = vadd.f32 %v240, %v244
        %v257 = vlaneseq
        %v258 = vand.u32 %v257, 127
        %v259 = vlaneseq
        %v260 = vshrl.u32 %v259, 7
        %v261 = vsub.s32 %v258, %v260
        %v262 = vrot.slane %v195, %v261
        %v263 = vadd.s32 %v258, 4294967288
        %v264 = vlaneseq
        %v265 = vshrl.u32 %v264, 7
        %v266 = vsub.s32 %v263, %v265
        %v267 = vrot.slane %v198, %v266
        %vm268 = vcmask 130112
        %v269 = vsel %vm268, %v267, %v262
        %v273 = vadd.s32 %v258, 4294967280
        %v274 = vlaneseq
        %v275 = vshrl.u32 %v274, 7
        %v276 = vsub.s32 %v273, %v275
        %v277 = vrot.slane %v205, %v276
        %v278 = vadd.s32 %v258, 4294967272
        %v279 = vlaneseq
        %v280 = vshrl.u32 %v279, 7
        %v281 = vsub.s32 %v278, %v280
        %v282 = vrot.slane %v208, %v281
        %vm283 = vcmask 261312
        %v284 = vsel %vm283, %v282, %v277
        %v288 = vadd.s32 %v258, 4294967264
        %v289 = vlaneseq
        %v290 = vshrl.u32 %v289, 7
        %v291 = vsub.s32 %v288, %v290
        %v292 = vrot.slane %v219, %v291
        %v293 = vadd.s32 %v258, 4294967256
        %v294 = vlaneseq
        %v295 = vshrl.u32 %v294, 7
        %v296 = vsub.s32 %v293, %v295
        %v297 = vrot.slane %v222, %v296
        %vm298 = vcmask 392512
        %v299 = vsel %vm298, %v297, %v292
        %v303 = vadd.s32 %v258, 4294967248
        %v304 = vlaneseq
        %v305 = vshrl.u32 %v304, 7
        %v306 = vsub.s32 %v303, %v305
        %v307 = vrot.slane %v233, %v306
        %v308 = vadd.s32 %v258, 4294967240
        %v309 = vlaneseq
        %v310 = vshrl.u32 %v309, 7
        %v311 = vsub.s32 %v308, %v310
        %v312 = vrot.slane %v236, %v311
        %vm313 = vcmask 523712
        %v314 = vsel %vm313, %v312, %v307
        %v318 = vadd.s32 %v258, 4294967232
        %v319 = vlaneseq
        %v320 = vshrl.u32 %v319, 7
        %v321 = vsub.s32 %v318, %v320
        %v322 = vrot.slane %v247, %v321
        %v323 = vadd.s32 %v258, 4294967224
        %v324 = vlaneseq
        %v325 = vshrl.u32 %v324, 7
        %v326 = vsub.s32 %v323, %v325
        %v327 = vrot.slane %v250, %v326
        %vm328 = vcmask 654912
        %v329 = vsel %vm328, %v327, %v322
        %vm331 = vcmask 130048
        %v332 = vsel %vm331, %v269, %v284
        %vm333 = vcmask 261120
        %v334 = vsel %vm333, %v332, %v299
        %vm335 = vcmask 392192
        %v336 = vsel %vm335, %v334, %v314
        %vm337 = vcmask 523264
        %v338 = vsel %vm337, %v336, %v329
        %v339 = vmul.f32 %v338, 0.00390625
        %v340 = vld [vmem:[%s1] sm:$0xff]
        %v341 = vld [vmem:[%s1 + $0x8] sm:$0xff]
        %v342 = vld [vmem:[%s1 + $0x10] sm:$0xff]
        %v343 = vld [vmem:[%s1 + $0x18] sm:$0xff]
        %v344 = vld [vmem:[%s1 + $0x20] sm:$0xff]
        %v345 = vld [vmem:[%s1 + $0x28] sm:$0xff]
        %v346 = vld [vmem:[%s1 + $0x30] sm:$0xff]
        %v347 = vld [vmem:[%s1 + $0x38] sm:$0xff]
        %v348 = vld [vmem:[%s1 + $0x40] sm:$0xff]
        %v349 = vld [vmem:[%s1 + $0x48] sm:$0xff]
        %vm350 = vcmask 654336
        %v352 = vsel %vm350, %v339, 0
        %354 = vmatprep.subr.mxu0 0.0
        %355 = vmatpush1.msra.mxu0 %v340
        %356 = vmatprep.subr.mxu0 0.0
        %357 = vmatpush1.msra.mxu0 %v341
        %358 = vmatprep.subr.mxu0 0.0
        %359 = vmatpush1.msra.mxu0 %v342
        %360 = vmatprep.subr.mxu0 0.0
        %361 = vmatpush1.msra.mxu0 %v343
        %362 = vmatprep.subr.mxu0 0.0
        %363 = vmatpush1.msra.mxu0 %v344
        %364 = vmatprep.subr.mxu0 0.0
        %365 = vmatpush1.msra.mxu0 %v345
        %366 = vmatprep.subr.mxu0 0.0
        %367 = vmatpush1.msra.mxu0 %v346
        %368 = vmatprep.subr.mxu0 0.0
        %369 = vmatpush1.msra.mxu0 %v347
        %370 = vmatprep.subr.mxu0 0.0
        %371 = vmatpush1.msra.mxu0 %v348
        %372 = vmatprep.subr.mxu0 0.0
        %373 = vmatpush1.msra.mxu0 %v349
        %374 = vmatprep.subr.mxu0 0.0
        %375 = vmatpush1.msra.mxu0 0.0
        %376 = vmatprep.subr.mxu0 0.0
        %377 = vmatpush1.msra.mxu0 0.0
        %378 = vmatprep.subr.mxu0 0.0
        %379 = vmatpush1.msra.mxu0 0.0
        %380 = vmatprep.subr.mxu0 0.0
        %381 = vmatpush1.msra.mxu0 0.0
        %382 = vmatprep.subr.mxu0 0.0
        %383 = vmatpush1.msra.mxu0 0.0
        %384 = vmatprep.subr.mxu0 0.0
        %385 = vmatpush1.msra.mxu0 0.0
        %386 = vmatprep.subr.mxu0 0.0
        %387 = vmatpush1.msra.mxu0 0.0
        %388 = vmatprep.subr.mxu0 0.0
        %389 = vmatpush1.msra.mxu0 0.0
        %390 = vmatprep.subr.mxu0 0.0
        %391 = vmatpush1.msra.mxu0 0.0
        %392 = vmatprep.subr.mxu0 0.0
        %393 = vmatpush1.msra.mxu0 0.0
        %394 = vmatprep.subr.mxu0 0.0
        %395 = vmatpush1.msra.mxu0 0.0
        %396 = vmatprep.subr.mxu0 0.0
        %397 = vmatpush1.msra.mxu0 0.0
        %398 = vmatprep.subr.mxu0 0.0
        %399 = vmatpush1.msra.mxu0 0.0
        %400 = vmatprep.subr.mxu0 0.0
        %401 = vmatpush1.msra.mxu0 0.0
        %402 = vmatprep.subr.mxu0 0.0
        %403 = vmatpush1.msra.mxu0 0.0
        %404 = vmatprep.subr.mxu0 0.0
        %405 = vmatpush1.msra.mxu0 0.0
        %406 = vmatprep.subr.mxu0 0.0
        %407 = vmatpush1.msra.mxu0 0.0
        %408 = vmatprep.subr.mxu0 0.0
        %409 = vmatpush1.msra.mxu0 0.0
        %410 = vmatprep.subr.mxu0 0.0
        %411 = vmatpush1.msra.mxu0 0.0
        %412 = vmatprep.subr.mxu0 0.0
        %413 = vmatpush1.msra.mxu0 0.0
        %414 = vmatprep.subr.mxu0 0.0
        %415 = vmatpush1.msra.mxu0 0.0
        %416 = vmatprep.subr.mxu0 0.0
        %417 = vmatpush1.msra.mxu0 0.0
        %418 = vmatprep.mubr.f32.mxu0 0.0
        %419 = vmatmul.mubr.f32.gmra.mrb[0].mxu0 %v352
        %v420 = vpop.f32.mrb[0].mxu0
        %v421 = vadd.f32 0.0, %v420
        %v422 = vpop.f32.mrb[0].mxu0
        %423 = vdwg.mxu0
        %v424 = vmax.f32 %v421, 0.0
        %v425 = vld [vmem:[%s2] sm:$0x1f]
        %vm426 = vcmask 39936
        %v428 = vsel %vm426, %v424, 0
        %vm430 = vcmask 1044480
        %v432 = vsel %vm430, %v425, 0
        %434 = vmatprep.subr.mxu0 0.0
        %435 = vmatpush1.msra.mxu0 %v432
        %436 = vmatprep.subr.mxu0 0.0
        %437 = vmatpush1.msra.mxu0 0.0
        %438 = vmatprep.subr.mxu0 0.0
        %439 = vmatpush1.msra.mxu0 0.0
        %440 = vmatprep.subr.mxu0 0.0
        %441 = vmatpush1.msra.mxu0 0.0
        %442 = vmatprep.subr.mxu0 0.0
        %443 = vmatpush1.msra.mxu0 0.0
        %444 = vmatprep.subr.mxu0 0.0
        %445 = vmatpush1.msra.mxu0 0.0
        %446 = vmatprep.subr.mxu0 0.0
        %447 = vmatpush1.msra.mxu0 0.0
        %448 = vmatprep.subr.mxu0 0.0
        %449 = vmatpush1.msra.mxu0 0.0
        %450 = vmatprep.subr.mxu0 0.0
        %451 = vmatpush1.msra.mxu0 0.0
        %452 = vmatprep.subr.mxu0 0.0
        %453 = vmatpush1.msra.mxu0 0.0
        %454 = vmatprep.subr.mxu0 0.0
        %455 = vmatpush1.msra.mxu0 0.0
        %456 = vmatprep.subr.mxu0 0.0
        %457 = vmatpush1.msra.mxu0 0.0
        %458 = vmatprep.subr.mxu0 0.0
        %459 = vmatpush1.msra.mxu0 0.0
        %460 = vmatprep.subr.mxu0 0.0
        %461 = vmatpush1.msra.mxu0 0.0
        %462 = vmatprep.subr.mxu0 0.0
        %463 = vmatpush1.msra.mxu0 0.0
        %464 = vmatprep.subr.mxu0 0.0
        %465 = vmatpush1.msra.mxu0 0.0
        %466 = vmatprep.subr.mxu0 0.0
        %467 = vmatpush1.msra.mxu0 0.0
        %468 = vmatprep.subr.mxu0 0.0
        %469 = vmatpush1.msra.mxu0 0.0
        %470 = vmatprep.subr.mxu0 0.0
        %471 = vmatpush1.msra.mxu0 0.0
        %472 = vmatprep.subr.mxu0 0.0
        %473 = vmatpush1.msra.mxu0 0.0
        %474 = vmatprep.subr.mxu0 0.0
        %475 = vmatpush1.msra.mxu0 0.0
        %476 = vmatprep.subr.mxu0 0.0
        %477 = vmatpush1.msra.mxu0 0.0
        %478 = vmatprep.subr.mxu0 0.0
        %479 = vmatpush1.msra.mxu0 0.0
        %480 = vmatprep.subr.mxu0 0.0
        %481 = vmatpush1.msra.mxu0 0.0
        %482 = vmatprep.subr.mxu0 0.0
        %483 = vmatpush1.msra.mxu0 0.0
        %484 = vmatprep.subr.mxu0 0.0
        %485 = vmatpush1.msra.mxu0 0.0
        %486 = vmatprep.subr.mxu0 0.0
        %487 = vmatpush1.msra.mxu0 0.0
        %488 = vmatprep.subr.mxu0 0.0
        %489 = vmatpush1.msra.mxu0 0.0
        %490 = vmatprep.subr.mxu0 0.0
        %491 = vmatpush1.msra.mxu0 0.0
        %492 = vmatprep.subr.mxu0 0.0
        %493 = vmatpush1.msra.mxu0 0.0
        %494 = vmatprep.subr.mxu0 0.0
        %495 = vmatpush1.msra.mxu0 0.0
        %496 = vmatprep.subr.mxu0 0.0
        %497 = vmatpush1.msra.mxu0 0.0
        %498 = vmatprep.mubr.f32.mxu0 0.0
        %499 = vmatmul.mubr.f32.gmra.mrb[0].mxu0 %v428
        %v500 = vpop.f32.mrb[0].mxu0
        %v501 = vadd.f32 0.0, %v500
        %v502 = vpop.f32.mrb[0].mxu0
        %503 = vdwg.mxu0
        %v504 = vxor.u32 %v501, 2147483648
        %v505 = vmul.f32 %v504, 1.442695
        %v506 = vpow.pop %v505
        %v507 = vadd.f32 %v506, 1.0
        %v508 = vrcp.pop %v507
        %v509 = vmul.f32 1.0, %v508
        %v510 = vlaneseq
        %v511 = vshrl.u32 %v510, 7
        %v512 = vsub.s32 0, %v511
        %v513 = vrot.slane %v509, %v512
        %515 = vbcast.lane.b32.xlu0 %v513, 256
        %v516 = vpop.permute.xlu0 %515
        %s518 = sor.u32 256, 8
        %519 = vbcast.lane.b32.xlu0 %v513, %s518
        %v520 = vpop.permute.xlu0 %519
        %v521 = vmul.f32 %v251, %v516
        %v522 = vmul.f32 %v252, %v516
        %v523 = vmul.f32 %v253, %v520
        %v524 = vmul.f32 %v254, %v520
        %525 = vst [vmem:[%s188] sm:$0xff] %v521
        %526 = vst [vmem:[%s188 + $0x8] sm:$0xff] %v522
        %527 = vst [vmem:[%s188 + $0x10] sm:$0xff] %v523
        %528 = vst [vmem:[%s188 + $0x18] sm:$0xff] %v524
        %s529 = sand.u32 %s96, 1
        %s530 = scalar_lea.sflag [#allocation4], %s529
        %s531 = sand.u32 %s96, 1
        %s532 = smul.addr %s531, 32
        %s533 = scalar_lea.vmem [#allocation5], %s532
        // Predicated region
        $region37: #{tpu_custom_call.1} parent=31 // pred_check
          %p534 = pneg %p106
        $region38: #{tpu_custom_call.1} parent=31 // pred_check_branch
          %536 = sbr.rel (%p534) target = $region40
        $region39: #{tpu_custom_call.1} parent=31 // pred_region
          %s538 = ssub.s32 512, 512
          %539 = vsyncadd %s530, %s538
          %s540 = smul.addr %s20, 4
          %s541 = smul.addr %s540, 128
          %s542 = scalar_lea.hbm %s3, %s541
          %s543 = sshll.u32 %s533, 4
          %s544 = int_to_ptr.vmem [resolvable:$true] %s543
          %549 = dma.vmem_to_hbm [thread:$0]  %s544, 512, %s542, %s530, 256, 256, 16
        $region40: #{tpu_custom_call.1} parent=31 // pred_fallthru
          _
      $region32: #{tpu_custom_call.1} parent=5 // pred_fallthru
        _
      %p550 = scmp.le.s32.totalorder 2, %s15
      // Predicated region
      $region41: #{tpu_custom_call.1} parent=5 // pred_check
        %p551 = pneg %p550
      $region42: #{tpu_custom_call.1} parent=5 // pred_check_branch
        %553 = sbr.rel (%p551) target = $region44
      $region43: #{tpu_custom_call.1} parent=5 // pred_region
        %s554 = ssub.s32 %s15, 2
        // Predicated region
        $region45: #{tpu_custom_call.1} parent=43 // pred_check
          %p555 = pneg %p112
        $region46: #{tpu_custom_call.1} parent=43 // pred_check_branch
          %557 = sbr.rel (%p555) target = $region48
        $region47: #{tpu_custom_call.1} parent=43 // pred_region
          %s558 = sand.u32 %s97, 1
          %s559 = scalar_lea.sflag [#allocation4], %s558
          %s560 = sand.u32 %s97, 1
          %s561 = smul.addr %s560, 32
          %s562 = scalar_lea.vmem [#allocation5], %s561
          %563 = dma.done %s559, 512
        $region48: #{tpu_custom_call.1} parent=43 // pred_fallthru
          _
      $region44: #{tpu_custom_call.1} parent=5 // pred_fallthru
        _
    $region6: #{tpu_custom_call.1} parent=1 // loop_footer
      %s19 = sadd.s32 1, %s15
    $region7: #{tpu_custom_call.1} parent=1 // loop_footer_branch
      %14 = sbr.rel target = $region3
    $region8: #{tpu_custom_call.1} parent=1 // loop_exit
      _
    %564 = vsyncpa [#allocation3], 1
    %s565 = scalar_lea.sflag [#allocation3], 1
    %566 = vsyncpa %s565, 1
    %567 = vsyncpa [#allocation4], 1
    %s568 = scalar_lea.sflag [#allocation4], 1
    %569 = vsyncpa %s568, 1

</llo_original>
